<compile_context>
chip_gen: v5e
topology: v5e:2x2
jax: 0.10.0
libtpu: 0.0.40
codegen_flags: <defaults>
</compile_context>

<pallas_src>
import functools

import jax
import jax.numpy as jnp
import numpy as np
from jax.experimental import pallas as pl
from jax.experimental.pallas import tpu as pltpu


@functools.lru_cache(maxsize=None)
def _bilinear_weight_matrix(out_size: int, in_size: int) -> np.ndarray:
    """Row-stochastic [out_size, in_size] PIL-style BILINEAR resize matrix.

    Triangle filter whose support is widened by the downscale factor (antialias),
    renormalized at the borders; reduces to 2-tap bilinear on upscale.  Window
    bounds use truncation toward zero like PIL's C code (then clamped to range).
    """
    scale = in_size / out_size
    filterscale = max(scale, 1.0)          # antialias only when downscaling
    support = filterscale                  # BILINEAR filter radius = 1.0
    w = np.zeros((out_size, in_size), dtype=np.float64)
    for i in range(out_size):
        center = (i + 0.5) * scale
        lo = max(int(center - support + 0.5), 0)
        hi = min(int(center + support + 0.5), in_size)
        js = np.arange(lo, hi)
        k = np.clip(1.0 - np.abs((js + 0.5 - center) / filterscale), 0.0, None)
        w[i, lo:hi] = k / k.sum()
    return w.astype(np.float32)


def _pick_block_samples(n, c, hp, w, r, x_itemsize):
    """Samples per grid step: fill VMEM / the MXU M-dim while staying TPU-safe."""
    if n <= 1:
        return 1
    budget = 12 << 20                                # comfortable on v5e/v7x scoped VMEM
    per_sample = (2 * c * hp * w * x_itemsize        # double-buffered input block
                  + hp * c * r * 2                   # bf16 lane-interleave scratch
                  + 2 * c * r * r * 4)               # double-buffered f32 output block
    cap_vmem = max(1, budget // max(per_sample, 1))
    cap_unroll = max(1, 64 // max(c, 1))             # bound the static interleave unroll
    cap_cores = max(1, n // 2)                       # keep grid >= 2 for v7x's two TCs
    return int(min(cap_vmem, cap_unroll, cap_cores, n))


def _resize_norm_kernel(x_ref, wwt_ref, wh_ref, o_ref, ys_ref, *, bias):
    """Per grid step: o = Wh @ interleave(x_block @ WwT_scaled) - bias.

    WwT_scaled carries 1/std (and 1/255 for uint8); bias = mean/std is a
    compile-time constant, so there is no divide and no scalar operand.
    """
    nb, C, Hp, W = x_ref.shape
    R = wh_ref.shape[0]

    # Width resize: one big MXU matmul with all samples & channels stacked on M.
    # Hp % 8 == 0 keeps this reshape layout-preserving; bf16 operands, f32 acc.
    x = x_ref[...].reshape(nb * C * Hp, W).astype(jnp.bfloat16)
    y = jnp.dot(x, wwt_ref[...], preferred_element_type=jnp.float32)
    y = y.astype(jnp.bfloat16)                                  # (nb*C*Hp, R)

    # Lane-interleave the (sample, channel) chunks so the height resize is a single
    # lane-dense matmul and the output store is lane-dense.  Static unroll; row
    # slices are Hp-aligned and lane offsets are static.
    for i in range(nb * C):
        ys_ref[:, i * R:(i + 1) * R] = y[i * Hp:(i + 1) * Hp, :]

    # Height resize + normalize: (R, Hp) @ (Hp, nb*C*R), f32 accumulation.
    out = jnp.dot(wh_ref[...], ys_ref[...], preferred_element_type=jnp.float32)
    o_ref[...] = out - bias


@functools.partial(jax.jit, static_argnames=("resize_value", "scale", "bias"))
def _transform_batch(x, *, resize_value, scale, bias):
    """Resize+normalize a stacked (N, C, H, W) batch in one pallas_call."""
    N, C, H, W = x.shape
    R = resize_value
    itemsize = jnp.dtype(x.dtype).itemsize

    Hp = -(-H // 8) * 8                    # sublane-align H (pad rows with zeros)
    nb = _pick_block_samples(N, C, Hp, W, R, itemsize)
    G = -(-N // nb)
    Np = G * nb
    lanes = nb * C * R

    x = jnp.pad(x, ((0, Np - N), (0, 0), (0, Hp - H), (0, 0)))

    # Compile-time constants (lru_cached numpy baked into the executable), bf16
    # operands.  1/std (and 1/255 for uint8) folded into WwT; Wh zero-padded to Hp.
    wwt = jnp.asarray(_bilinear_weight_matrix(R, W).T * scale, dtype=jnp.bfloat16)  # (W, R)
    wh_np = np.zeros((R, Hp), dtype=np.float32)
    wh_np[:, :H] = _bilinear_weight_matrix(R, H)
    wh = jnp.asarray(wh_np, dtype=jnp.bfloat16)                                     # (R, Hp)

    vmem_bytes = (2 * nb * C * Hp * W * itemsize     # input block, double-buffered
                  + 2 * 2 * (W * R + R * Hp)         # bf16 weights, double-buffered
                  + Hp * lanes * 2                   # bf16 interleave scratch
                  + 2 * R * lanes * 4)               # f32 output block, double-buffered
    vmem_limit = int(min(max(1.5 * vmem_bytes + (4 << 20), 16 << 20), 48 << 20))

    grid_spec = pltpu.PrefetchScalarGridSpec(
        num_scalar_prefetch=0,
        grid=(G,),
        in_specs=[
            pl.BlockSpec((nb, C, Hp, W), lambda g: (g, 0, 0, 0)),   # x block (Nb samples)
            pl.BlockSpec((W, R), lambda g: (0, 0)),                 # WwT (scaled)
            pl.BlockSpec((R, Hp), lambda g: (0, 0)),                # Wh
        ],
        out_specs=pl.BlockSpec((pl.Squeezed(), R, lanes), lambda g: (g, 0, 0)),
        scratch_shapes=[pltpu.VMEM((Hp, lanes), jnp.bfloat16)],
    )

    out = pl.pallas_call(
        functools.partial(_resize_norm_kernel, bias=bias),
        out_shape=jax.ShapeDtypeStruct((G, R, lanes), jnp.float32),
        grid_spec=grid_spec,
        compiler_params=pltpu.CompilerParams(
            dimension_semantics=("parallel",),       # shard sample blocks across TCs
            vmem_limit_bytes=vmem_limit,
        ),
    )(x, wwt, wh)

    # (G, R, nb*C*R) -> (N, C, R, R): cheap XLA un-interleave outside the kernel.
    out = out.reshape(G, R, nb, C, R).transpose(0, 2, 3, 1, 4).reshape(Np, C, R, R)
    return out[:N]


class PairedValTransform:
    """JAX/Pallas port of gans_zoo.transforms.paired_transform.PairedValTransform.

    Note: torchvision/PIL resizes the uint8 image and re-quantizes to uint8 BEFORE
    to_tensor/normalize; this kernel resizes in float with 1/255 folded into the
    weights, so uint8 outputs can differ from PIL by up to per-tap uint8 rounding.
    """

    def __init__(self, resize_value: int):
        self.resize_value = resize_value
        self.mean = [0.5, 0.5, 0.5]
        self.std = [0.5, 0.5, 0.5]

    def __call__(self, inputs):
        if len(set(self.mean)) != 1 or len(set(self.std)) != 1:
            # TODO(synk): per-channel mean/std would need a (C,) operand folded into
            # per-channel weight columns; the module hard-codes uniform 0.5.
            raise NotImplementedError("non-uniform mean/std not supported")
        inv_std = 1.0 / float(self.std[0])
        bias = float(self.mean[0]) * inv_std

        # Group samples by (shape, dtype): each group -> ONE stacked pallas_call.
        groups = {}
        for idx, s in enumerate(inputs):
            s = jnp.asarray(s)
            groups.setdefault((s.shape, s.dtype), []).append((idx, s))

        results = [None] * len(inputs)
        for (_, dtype), items in groups.items():
            batch = jnp.stack([s for _, s in items], axis=0)
            scale = inv_std * (1.0 / 255.0 if dtype == jnp.uint8 else 1.0)
            out = _transform_batch(batch, resize_value=self.resize_value,
                                   scale=float(scale), bias=bias)
            for j, (idx, _) in enumerate(items):
                results[idx] = out[j]
        return results


if __name__ == "__main__":
    key = jax.random.PRNGKey(0)
    keys = jax.random.split(key, 5)

    # Five paired CHW float samples in [0, 1]; N=5 exercises Nb=2 blocking,
    # grid=(3,) parallel steps, and batch padding.
    samples = [jax.random.uniform(k, (3, 16, 16), dtype=jnp.float32) for k in keys]

    transform = PairedValTransform(resize_value=8)
    outs = transform(samples)
    outs = [jax.block_until_ready(o) for o in outs]

    # Float reference of the same math (resize-as-matmuls + normalize); bf16
    # operands with f32 accumulation keep errors well under the tolerance.
    def ref_one(s):
        s = np.asarray(s, np.float32)
        wh = _bilinear_weight_matrix(8, s.shape[1])
        ww = _bilinear_weight_matrix(8, s.shape[2])
        r = np.einsum("oh,chw,pw->cop", wh, s, ww)
        return (r - 0.5) / 0.5

    for o, s in zip(outs, samples):
        assert o.shape == (3, 8, 8) and o.dtype == jnp.float32
        np.testing.assert_allclose(np.asarray(o), ref_one(s), rtol=0.0, atol=4e-2)

    print("KERNEL_OK")
</pallas_src>

<mosaic_0001>
module attributes {stable_mosaic.version = 11 : i64} {
  func.func @_resize_norm_kernel(%arg0: i32, %arg1: memref<2x3x16x16xf32, #tpu.memory_space<vmem>>, %arg2: memref<16x8xbf16, #tpu.memory_space<vmem>>, %arg3: memref<8x16xbf16, #tpu.memory_space<vmem>>, %arg4: memref<1x8x48xf32, #tpu.memory_space<vmem>>, %arg5: memref<16x48xbf16, #tpu.memory_space<vmem>>) attributes {dimension_semantics = [#tpu.dimension_semantics<parallel>], iteration_bounds = array<i64: 3>, scalar_prefetch = 0 : i64, scratch_operands = 1 : i64, tpu.core_type = #tpu.core_type<tc>, window_params = [{transform_indices = @transform_0, window_bounds = array<i64: 2, 3, 16, 16>}, {pipeline_mode = #tpu.pipeline_mode<synchronous>, transform_indices = @transform_1, window_bounds = array<i64: 16, 8>}, {pipeline_mode = #tpu.pipeline_mode<synchronous>, transform_indices = @transform_2, window_bounds = array<i64: 8, 16>}, {transform_indices = @transform_3, window_bounds = array<i64: 1, 8, 48>}]} {
    %c0 = arith.constant 0 : index
    %c0_0 = arith.constant 0 : index
    %c0_1 = arith.constant 0 : index
    %c0_2 = arith.constant 0 : index
    %0 = vector.load %arg1[%c0, %c0_0, %c0_1, %c0_2] : memref<2x3x16x16xf32, #tpu.memory_space<vmem>>, vector<2x3x16x16xf32>
    %1 = vector.shape_cast %0 : vector<2x3x16x16xf32> to vector<96x16xf32>
    %2 = arith.truncf %1 : vector<96x16xf32> to vector<96x16xbf16>
    %c0_3 = arith.constant 0 : index
    %c0_4 = arith.constant 0 : index
    %3 = vector.load %arg2[%c0_3, %c0_4] : memref<16x8xbf16, #tpu.memory_space<vmem>>, vector<16x8xbf16>
    %cst = arith.constant dense<0.000000e+00> : vector<96x8xf32>
    %4 = tpu.matmul %2, %3, %cst {dimension_numbers = #tpu.dot_dimension_numbers<[1], [0], [0], [1], [0, 0, 1, 1], [], []>} : vector<96x16xbf16>, vector<16x8xbf16>, vector<96x8xf32> -> vector<96x8xf32>
    %5 = arith.truncf %4 : vector<96x8xf32> to vector<96x8xbf16>
    %6 = vector.extract_strided_slice %5 {offsets = [0, 0], sizes = [16, 8], strides = [1, 1]} : vector<96x8xbf16> to vector<16x8xbf16>
    %c0_5 = arith.constant 0 : index
    %c0_6 = arith.constant 0 : index
    %7 = vector.load %arg5[%c0_5, %c0_6] : memref<16x48xbf16, #tpu.memory_space<vmem>>, vector<16x8xbf16>
    tpu.vector_store %arg5[%c0_5, %c0_6], %6 {strides = array<i32>} : memref<16x48xbf16, #tpu.memory_space<vmem>>, vector<16x8xbf16>,
    %8 = vector.extract_strided_slice %5 {offsets = [16, 0], sizes = [16, 8], strides = [1, 1]} : vector<96x8xbf16> to vector<16x8xbf16>
    %c0_7 = arith.constant 0 : index
    %c8 = arith.constant 8 : index
    %9 = vector.load %arg5[%c0_7, %c8] : memref<16x48xbf16, #tpu.memory_space<vmem>>, vector<16x8xbf16>
    tpu.vector_store %arg5[%c0_7, %c8], %8 {strides = array<i32>} : memref<16x48xbf16, #tpu.memory_space<vmem>>, vector<16x8xbf16>,
    %10 = vector.extract_strided_slice %5 {offsets = [32, 0], sizes = [16, 8], strides = [1, 1]} : vector<96x8xbf16> to vector<16x8xbf16>
    %c0_8 = arith.constant 0 : index
    %c16 = arith.constant 16 : index
    %11 = vector.load %arg5[%c0_8, %c16] : memref<16x48xbf16, #tpu.memory_space<vmem>>, vector<16x8xbf16>
    tpu.vector_store %arg5[%c0_8, %c16], %10 {strides = array<i32>} : memref<16x48xbf16, #tpu.memory_space<vmem>>, vector<16x8xbf16>,
    %12 = vector.extract_strided_slice %5 {offsets = [48, 0], sizes = [16, 8], strides = [1, 1]} : vector<96x8xbf16> to vector<16x8xbf16>
    %c0_9 = arith.constant 0 : index
    %c24 = arith.constant 24 : index
    %13 = vector.load %arg5[%c0_9, %c24] : memref<16x48xbf16, #tpu.memory_space<vmem>>, vector<16x8xbf16>
    tpu.vector_store %arg5[%c0_9, %c24], %12 {strides = array<i32>} : memref<16x48xbf16, #tpu.memory_space<vmem>>, vector<16x8xbf16>,
    %14 = vector.extract_strided_slice %5 {offsets = [64, 0], sizes = [16, 8], strides = [1, 1]} : vector<96x8xbf16> to vector<16x8xbf16>
    %c0_10 = arith.constant 0 : index
    %c32 = arith.constant 32 : index
    %15 = vector.load %arg5[%c0_10, %c32] : memref<16x48xbf16, #tpu.memory_space<vmem>>, vector<16x8xbf16>
    tpu.vector_store %arg5[%c0_10, %c32], %14 {strides = array<i32>} : memref<16x48xbf16, #tpu.memory_space<vmem>>, vector<16x8xbf16>,
    %16 = vector.extract_strided_slice %5 {offsets = [80, 0], sizes = [16, 8], strides = [1, 1]} : vector<96x8xbf16> to vector<16x8xbf16>
    %c0_11 = arith.constant 0 : index
    %c40 = arith.constant 40 : index
    %17 = vector.load %arg5[%c0_11, %c40] : memref<16x48xbf16, #tpu.memory_space<vmem>>, vector<16x8xbf16>
    tpu.vector_store %arg5[%c0_11, %c40], %16 {strides = array<i32>} : memref<16x48xbf16, #tpu.memory_space<vmem>>, vector<16x8xbf16>,
    %c0_12 = arith.constant 0 : index
    %c0_13 = arith.constant 0 : index
    %18 = vector.load %arg3[%c0_12, %c0_13] : memref<8x16xbf16, #tpu.memory_space<vmem>>, vector<8x16xbf16>
    %c0_14 = arith.constant 0 : index
    %c0_15 = arith.constant 0 : index
    %19 = vector.load %arg5[%c0_14, %c0_15] : memref<16x48xbf16, #tpu.memory_space<vmem>>, vector<16x48xbf16>
    %cst_16 = arith.constant dense<0.000000e+00> : vector<8x48xf32>
    %20 = tpu.matmul %18, %19, %cst_16 {dimension_numbers = #tpu.dot_dimension_numbers<[1], [0], [0], [1], [0, 0, 1, 1], [], []>} : vector<8x16xbf16>, vector<16x48xbf16>, vector<8x48xf32> -> vector<8x48xf32>
    %cst_17 = arith.constant 1.000000e+00 : f32
    %21 = vector.broadcast %cst_17 : f32 to vector<8x48xf32>
    %22 = arith.subf %20, %21 : vector<8x48xf32>
    %c0_18 = arith.constant 0 : index
    %c0_19 = arith.constant 0 : index
    %c0_20 = arith.constant 0 : index
    %23 = vector.load %arg4[%c0_18, %c0_19, %c0_20] : memref<1x8x48xf32, #tpu.memory_space<vmem>>, vector<1x8x48xf32>
    %24 = vector.shape_cast %23 : vector<1x8x48xf32> to vector<8x48xf32>
    %25 = vector.shape_cast %22 : vector<8x48xf32> to vector<1x8x48xf32>
    tpu.vector_store %arg4[%c0_18, %c0_19, %c0_20], %25 {strides = array<i32>} : memref<1x8x48xf32, #tpu.memory_space<vmem>>, vector<1x8x48xf32>,
    return
  }
  func.func @transform_0(%arg0: i32) -> (i32, i32, i32, i32) {
    %c0_i32 = arith.constant 0 : i32
    %c0_i32_0 = arith.constant 0 : i32
    %c0_i32_1 = arith.constant 0 : i32
    %c0_i32_2 = arith.constant 0 : i32
    return %arg0, %c0_i32, %c0_i32_0, %c0_i32_1 : i32, i32, i32, i32
  }
  func.func @transform_1(%arg0: i32) -> (i32, i32) {
    %c0_i32 = arith.constant 0 : i32
    %c0_i32_0 = arith.constant 0 : i32
    %c0_i32_1 = arith.constant 0 : i32
    return %c0_i32, %c0_i32_0 : i32, i32
  }
  func.func @transform_2(%arg0: i32) -> (i32, i32) {
    %c0_i32 = arith.constant 0 : i32
    %c0_i32_0 = arith.constant 0 : i32
    %c0_i32_1 = arith.constant 0 : i32
    return %c0_i32, %c0_i32_0 : i32, i32
  }
  func.func @transform_3(%arg0: i32) -> (i32, i32, i32) {
    %c0_i32 = arith.constant 0 : i32
    %c0_i32_0 = arith.constant 0 : i32
    %c0_i32_1 = arith.constant 0 : i32
    return %arg0, %c0_i32, %c0_i32_0 : i32, i32, i32
  }
}

</mosaic_0001>

<llo_original>
// kernel: _transform_batch.1
$region0: #{_transform_batch.1}
  #allocation0 [shape = 'u32[]', space=smem, size = 0x4, offset = 0x4, fixed_abs, tag = 'smem constant byte address 0x4 - core index']
  #allocation1 [shape = 'u32[72,128]{1,0:T(1,128)}', space=vmem, size = 0x9000, scoped, tag = 'internal scratch']
  #allocation2 [shape = 'bf16[16,48]{1,0:T(8,128)(2,1)}', space=vmem, size = 0x1000, scoped, tag = 'scratch operand']
  %s0 = inlined_call_operand.vmem [shape: f32[6,3,16,16], index: 0, kind: input, shape index: {}]
  %s1 = inlined_call_operand.vmem [shape: bf16[16,8], index: 1, kind: input, shape index: {}]
  %s2 = inlined_call_operand.vmem [shape: bf16[8,16], index: 2, kind: input, shape index: {}]
  %s3 = inlined_call_operand.vmem [shape: f32[3,8,48], index: 3, kind: output, shape index: {}]
  %s4 = sld [smem:[#allocation0]]
  $region45: #{_transform_batch.1} parent=0
    _
  %s6 = ssub.s32 1, %s4
  %s7 = scalar_select 0, %s6, %s4
  loop: start=0, step=1, limit=5
  $region2: #{_transform_batch.1} parent=0 // loop_pre_header
    _
  $region3: #{_transform_batch.1} parent=0 // loop_header
    %s9 = sphi 0, %s13
    %p10 = scmp.ge.s32.totalorder %s9, 5
    %s19 = sphi 0, %s21
    %s22 = sphi 0, %s19
    %s23 = sphi 0, %s22
    %s39 = sphi 0, %s23
    %s43 = sphi 0, %s43
    %s45 = sphi 0, %s43
    %s46 = sphi 0, %s45
    %s60 = sphi 0, %s46
    %s64 = sphi 0, %s64
    %s66 = sphi 0, %s64
    %s67 = sphi 0, %s66
    %s81 = sphi 0, %s67
    %s87 = sphi 0, %s89
    %s90 = sphi 0, %s87
    %s91 = sphi 0, %s90
    %s107 = sphi 0, %s91
  $region4: #{_transform_batch.1} parent=0 // loop_header_branch
    %12 = sbr.rel (%p10) target = $region8
  $region5: #{_transform_batch.1} parent=0 // loop_body
    %s14 = ssub.s32 %s9, 1
    %s15 = ssub.s32 %s9, 2
    %s16 = sadd.s32 %s9, 1
    %s17 = ssub.s32 %s9, %s16
    %p18 = scmp.eq.s32.totalorder %s17, 0
    %s20 = sadd.s32 %s19, 1
    %s21 = scalar_select %p18, %s19, %s20
    %p24 = pneg %p18
    %p25 = scmp.eq.s32.totalorder %s9, 2
    %p26 = por %p24, %p25
    %p27 = scmp.ne.s32.totalorder %s19, %s22
    %p28 = scmp.eq.s32.totalorder %s9, 0
    %p29 = por %p27, %p28
    %p30 = scmp.ne.s32.totalorder %s19, %s22
    %p31 = scmp.eq.s32.totalorder %s14, 2
    %p32 = por %p30, %p31
    %p33 = scmp.ne.s32.totalorder %s22, %s23
    %p34 = scmp.eq.s32.totalorder %s14, 0
    %p35 = por %p33, %p34
    %p36 = scmp.ne.s32.totalorder %s22, %s23
    %p37 = scmp.eq.s32.totalorder %s15, 2
    %p38 = por %p36, %p37
    %p40 = scmp.ne.s32.totalorder %s23, %s39
    %p41 = scmp.eq.s32.totalorder %s15, 0
    %p42 = por %p40, %p41
    %s44 = sadd.s32 %s43, 1
    %p47 = scmp.eq.s32.totalorder %s9, 2
    %p48 = scmp.ne.s32.totalorder %s43, %s45
    %p49 = scmp.eq.s32.totalorder %s9, 0
    %p50 = por %p48, %p49
    %p51 = scmp.ne.s32.totalorder %s43, %s45
    %p52 = scmp.eq.s32.totalorder %s14, 2
    %p53 = por %p51, %p52
    %p54 = scmp.ne.s32.totalorder %s45, %s46
    %p55 = scmp.eq.s32.totalorder %s14, 0
    %p56 = por %p54, %p55
    %p57 = scmp.ne.s32.totalorder %s45, %s46
    %p58 = scmp.eq.s32.totalorder %s15, 2
    %p59 = por %p57, %p58
    %p61 = scmp.ne.s32.totalorder %s46, %s60
    %p62 = scmp.eq.s32.totalorder %s15, 0
    %p63 = por %p61, %p62
    %s65 = sadd.s32 %s64, 1
    %p68 = scmp.eq.s32.totalorder %s9, 2
    %p69 = scmp.ne.s32.totalorder %s64, %s66
    %p70 = scmp.eq.s32.totalorder %s9, 0
    %p71 = por %p69, %p70
    %p72 = scmp.ne.s32.totalorder %s64, %s66
    %p73 = scmp.eq.s32.totalorder %s14, 2
    %p74 = por %p72, %p73
    %p75 = scmp.ne.s32.totalorder %s66, %s67
    %p76 = scmp.eq.s32.totalorder %s14, 0
    %p77 = por %p75, %p76
    %p78 = scmp.ne.s32.totalorder %s66, %s67
    %p79 = scmp.eq.s32.totalorder %s15, 2
    %p80 = por %p78, %p79
    %p82 = scmp.ne.s32.totalorder %s67, %s81
    %p83 = scmp.eq.s32.totalorder %s15, 0
    %p84 = por %p82, %p83
    %s85 = ssub.s32 %s9, %s16
    %p86 = scmp.eq.s32.totalorder %s85, 0
    %s88 = sadd.s32 %s87, 1
    %s89 = scalar_select %p86, %s87, %s88
    %p92 = pneg %p86
    %p93 = scmp.eq.s32.totalorder %s9, 2
    %p94 = por %p92, %p93
    %p95 = scmp.ne.s32.totalorder %s87, %s90
    %p96 = scmp.eq.s32.totalorder %s9, 0
    %p97 = por %p95, %p96
    %p98 = scmp.ne.s32.totalorder %s87, %s90
    %p99 = scmp.eq.s32.totalorder %s14, 2
    %p100 = por %p98, %p99
    %p101 = scmp.ne.s32.totalorder %s90, %s91
    %p102 = scmp.eq.s32.totalorder %s14, 0
    %p103 = por %p101, %p102
    %p104 = scmp.ne.s32.totalorder %s90, %s91
    %p105 = scmp.eq.s32.totalorder %s15, 2
    %p106 = por %p104, %p105
    %p108 = scmp.ne.s32.totalorder %s91, %s107
    %p109 = scmp.eq.s32.totalorder %s15, 0
    %p110 = por %p108, %p109
    %p111 = scmp.le.s32.totalorder 1, %s9
    %p112 = scmp.lt.s32.totalorder %s9, 4
    %p113 = pnand %p111, %p112
    %p114 = pneg %p113
    // Predicated region
    $region9: #{_transform_batch.1} parent=5 // pred_check
      _
    $region10: #{_transform_batch.1} parent=5 // pred_check_branch
      %116 = sbr.rel (%p113) target = $region12
    $region11: #{_transform_batch.1} parent=5 // pred_region
      %s117 = ssub.s32 %s9, 1
      // Predicated region
      $region13: #{_transform_batch.1} parent=11 // pred_check
        %p118 = pneg %p56
      $region14: #{_transform_batch.1} parent=11 // pred_check_branch
        %120 = sbr.rel (%p118) target = $region16
      $region15: #{_transform_batch.1} parent=11 // pred_region
        _
      $region16: #{_transform_batch.1} parent=11 // pred_fallthru
        _
      // Predicated region
      $region17: #{_transform_batch.1} parent=11 // pred_check
        %p121 = pneg %p77
      $region18: #{_transform_batch.1} parent=11 // pred_check_branch
        %123 = sbr.rel (%p121) target = $region20
      $region19: #{_transform_batch.1} parent=11 // pred_region
        _
      $region20: #{_transform_batch.1} parent=11 // pred_fallthru
        _
    $region12: #{_transform_batch.1} parent=5 // pred_fallthru
      _
    %p124 = scmp.lt.s32.totalorder %s9, 3
    // Predicated region
    $region21: #{_transform_batch.1} parent=5 // pred_check
      %p125 = pneg %p124
    $region22: #{_transform_batch.1} parent=5 // pred_check_branch
      %127 = sbr.rel (%p125) target = $region24
    $region23: #{_transform_batch.1} parent=5 // pred_region
      // Predicated region
      $region25: #{_transform_batch.1} parent=23 // pred_check
        %p128 = pneg %p29
      $region26: #{_transform_batch.1} parent=23 // pred_check_branch
        %130 = sbr.rel (%p128) target = $region28
      $region27: #{_transform_batch.1} parent=23 // pred_region
        %s131 = smul.u32 2, %s9
        %p132 = scmp.lt.s32.totalorder %s131, 5
        %s133 = scalar_select %p132, %s131, 5
        %s134 = smul.addr %s133, 6
        %s135 = smul.addr %s134, 8
        %s136 = scalar_lea.vmem %s0, %s135
        %s137 = smul.u32 2, %s9
      $region28: #{_transform_batch.1} parent=23 // pred_fallthru
        _
    $region24: #{_transform_batch.1} parent=5 // pred_fallthru
      _
    %p138 = scmp.le.s32.totalorder 1, %s9
    %p139 = scmp.lt.s32.totalorder %s9, 4
    %p140 = pnand %p138, %p139
    %p141 = pneg %p140
    // Predicated region
    $region29: #{_transform_batch.1} parent=5 // pred_check
      _
    $region30: #{_transform_batch.1} parent=5 // pred_check_branch
      %143 = sbr.rel (%p140) target = $region32
    $region31: #{_transform_batch.1} parent=5 // pred_region
      %s144 = ssub.s32 %s9, 1
      %s145 = smul.u32 2, %s14
      %p146 = scmp.lt.s32.totalorder %s145, 5
      %s147 = scalar_select %p146, %s145, 5
      %s148 = smul.addr %s147, 6
      %s149 = smul.addr %s148, 8
      %s150 = scalar_lea.vmem %s0, %s149
      %p151 = pneg %p35
      %p152 = pneg %p32
      %p153 = pneg %p56
      %p154 = pneg %p53
      %p155 = pneg %p77
      %p156 = pneg %p74
      %p157 = pneg %p103
      %p158 = pneg %p100
      %p159 = scmp.lt.s32.totalorder %s14, 2
      %s160 = scalar_select %p159, %s14, 2
      %s161 = smul.addr %s160, 8
      %s162 = scalar_lea.vmem %s3, %s161
      %s163 = smul.u32 2, %s14
      %p164 = scmp.lt.s32.totalorder %s163, 5
      %s165 = scalar_select %p164, %s163, 5
      %s166 = smul.addr %s165, 6
      %s167 = smul.addr %s166, 8
      %s168 = scalar_lea.vmem %s0, %s167
      %s169 = smul.u32 2, %s14
      %p170 = scmp.lt.s32.totalorder %s14, 2
      %s171 = scalar_select %p170, %s14, 2
      %s172 = smul.addr %s171, 8
      %s173 = scalar_lea.vmem %s3, %s172
      %v175 = vld [vmem:[%s168] sm:$0xff]
      %v176 = vld [vmem:[%s168 + $0x8] sm:$0xff]
      %v177 = vld [vmem:[%s168 + $0x10] sm:$0xff]
      %v178 = vld [vmem:[%s168 + $0x18] sm:$0xff]
      %v179 = vld [vmem:[%s168 + $0x20] sm:$0xff]
      %v180 = vld [vmem:[%s168 + $0x28] sm:$0xff]
      %v181 = vld [vmem:[%s168 + $0x30] sm:$0xff]
      %v182 = vld [vmem:[%s168 + $0x38] sm:$0xff]
      %v183 = vld [vmem:[%s168 + $0x40] sm:$0xff]
      %v184 = vld [vmem:[%s168 + $0x48] sm:$0xff]
      %v185 = vld [vmem:[%s168 + $0x50] sm:$0xff]
      %v186 = vld [vmem:[%s168 + $0x58] sm:$0xff]
      %v187 = vpack.c.bf16 %v176, %v175
      %v188 = vpack.c.bf16 %v178, %v177
      %v189 = vpack.c.bf16 %v180, %v179
      %v190 = vpack.c.bf16 %v182, %v181
      %v191 = vpack.c.bf16 %v184, %v183
      %v192 = vpack.c.bf16 %v186, %v185
      %v193 = vld [vmem:[%s1] sm:$0xf]
      %v194 = vld [vmem:[%s1 + $0x4] sm:$0xf]
      %v197 = vunpack.c.l.b16 %v193
      %v198 = vunpack.c.l.b16 %v194
      %v199 = vpack.c.b16 %v198, %v197
      %vm201 = vcmask 130048
      %v203 = vsel %vm201, %v187, 0
      %v206 = vsel %vm201, %v188, 0
      %v209 = vsel %vm201, %v189, 0
      %v212 = vsel %vm201, %v190, 0
      %v215 = vsel %vm201, %v191, 0
      %v218 = vsel %vm201, %v192, 0
      %220 = vmatpush.bf16.msra.mxu0 0
      %221 = vmatpush.bf16.msra.mxu0 0
      %222 = vmatpush.bf16.msra.mxu0 0
      %223 = vmatpush.bf16.msra.mxu0 0
      %224 = vmatpush.bf16.msra.mxu0 0
      %225 = vmatpush.bf16.msra.mxu0 0
      %226 = vmatpush.bf16.msra.mxu0 0
      %227 = vmatpush.bf16.msra.mxu0 %v199
      %228 = vmatmul.bf16.gmra.mxu0 %v203
      %v229 = vpop.f32.mrf.mxu0
      %v230 = vadd.f32 0.0, %v229
      %v231 = vpop.f32.mrf.mxu0
      %v232 = vadd.f32 0.0, %v231
      %233 = vmatmul.bf16.gmra.mxu0 %v206
      %v234 = vpop.f32.mrf.mxu0
      %v235 = vadd.f32 0.0, %v234
      %v236 = vpop.f32.mrf.mxu0
      %v237 = vadd.f32 0.0, %v236
      %238 = vmatmul.bf16.gmra.mxu0 %v209
      %v239 = vpop.f32.mrf.mxu0
      %v240 = vadd.f32 0.0, %v239
      %v241 = vpop.f32.mrf.mxu0
      %v242 = vadd.f32 0.0, %v241
      %243 = vmatmul.bf16.gmra.mxu0 %v212
      %v244 = vpop.f32.mrf.mxu0
      %v245 = vadd.f32 0.0, %v244
      %v246 = vpop.f32.mrf.mxu0
      %v247 = vadd.f32 0.0, %v246
      %248 = vmatmul.bf16.gmra.mxu0 %v215
      %v249 = vpop.f32.mrf.mxu0
      %v250 = vadd.f32 0.0, %v249
      %v251 = vpop.f32.mrf.mxu0
      %v252 = vadd.f32 0.0, %v251
      %253 = vmatmul.bf16.gmra.mxu0 %v218
      %v254 = vpop.f32.mrf.mxu0
      %v255 = vadd.f32 0.0, %v254
      %v256 = vpop.f32.mrf.mxu0
      %v257 = vadd.f32 0.0, %v256
      %258 = vdwg.mxu0
      %v259 = vpack.c.bf16 %v230, %v230
      %v260 = vpack.c.bf16 %v232, %v232
      %v261 = vpack.c.bf16 %v235, %v235
      %v262 = vpack.c.bf16 %v237, %v237
      %v263 = vpack.c.bf16 %v240, %v240
      %v264 = vpack.c.bf16 %v242, %v242
      %v265 = vpack.c.bf16 %v245, %v245
      %v266 = vpack.c.bf16 %v247, %v247
      %v267 = vpack.c.bf16 %v250, %v250
      %v268 = vpack.c.bf16 %v252, %v252
      %v269 = vpack.c.bf16 %v255, %v255
      %v270 = vpack.c.bf16 %v257, %v257
      %vm271 = vcmask 60416
      %272 = vst.msk [vmem:[#allocation2] sm:$0xf] %vm271, %v259
      %273 = vst.msk [vmem:[#allocation2 + $0x4] sm:$0xf] %vm271, %v260
      %276 = vrot.lane.b32.xlu0 %v261, 8
      %v277 = vpop.permute.xlu0 %276
      %278 = vrot.lane.b32.xlu0 %v262, 8
      %v279 = vpop.permute.xlu0 %278
      %vm282 = vcmask 126016
      %283 = vst.msk [vmem:[#allocation2] sm:$0xf] %vm282, %v277
      %284 = vst.msk [vmem:[#allocation2 + $0x4] sm:$0xf] %vm282, %v279
      %287 = vrot.lane.b32.xlu0 %v263, 16
      %v288 = vpop.permute.xlu0 %287
      %289 = vrot.lane.b32.xlu0 %v264, 16
      %v290 = vpop.permute.xlu0 %289
      %vm293 = vcmask 191616
      %294 = vst.msk [vmem:[#allocation2] sm:$0xf] %vm293, %v288
      %295 = vst.msk [vmem:[#allocation2 + $0x4] sm:$0xf] %vm293, %v290
      %298 = vrot.lane.b32.xlu0 %v265, 24
      %v299 = vpop.permute.xlu0 %298
      %300 = vrot.lane.b32.xlu0 %v266, 24
      %v301 = vpop.permute.xlu0 %300
      %vm304 = vcmask 257216
      %305 = vst.msk [vmem:[#allocation2] sm:$0xf] %vm304, %v299
      %306 = vst.msk [vmem:[#allocation2 + $0x4] sm:$0xf] %vm304, %v301
      %309 = vrot.lane.b32.xlu0 %v267, 32
      %v310 = vpop.permute.xlu0 %309
      %311 = vrot.lane.b32.xlu0 %v268, 32
      %v312 = vpop.permute.xlu0 %311
      %vm315 = vcmask 322816
      %316 = vst.msk [vmem:[#allocation2] sm:$0xf] %vm315, %v310
      %317 = vst.msk [vmem:[#allocation2 + $0x4] sm:$0xf] %vm315, %v312
      %320 = vrot.lane.b32.xlu0 %v269, 40
      %v321 = vpop.permute.xlu0 %320
      %322 = vrot.lane.b32.xlu0 %v270, 40
      %v323 = vpop.permute.xlu0 %322
      %vm326 = vcmask 388416
      %327 = vst.msk [vmem:[#allocation2] sm:$0xf] %vm326, %v321
      %328 = vst.msk [vmem:[#allocation2 + $0x4] sm:$0xf] %vm326, %v323
      %v329 = vld [vmem:[%s2] sm:$0xf]
      %v330 = vld [vmem:[#allocation2] sm:$0xf]
      %v331 = vld [vmem:[#allocation2 + $0x4] sm:$0xf]
      %v334 = vunpack.c.l.b16 %v330
      %v335 = vunpack.c.l.b16 %v331
      %v336 = vpack.c.b16 %v335, %v334
      %v339 = vsel %vm201, %v329, 0
      %341 = vmatpush.bf16.msra.mxu0 0
      %342 = vmatpush.bf16.msra.mxu0 0
      %343 = vmatpush.bf16.msra.mxu0 0
      %344 = vmatpush.bf16.msra.mxu0 0
      %345 = vmatpush.bf16.msra.mxu0 0
      %346 = vmatpush.bf16.msra.mxu0 0
      %347 = vmatpush.bf16.msra.mxu0 0
      %348 = vmatpush.bf16.msra.mxu0 %v336
      %349 = vmatmul.bf16.gmra.mxu0 %v339
      %v350 = vpop.f32.mrf.mxu0
      %v351 = vadd.f32 0.0, %v350
      %v352 = vpop.f32.mrf.mxu0
      %353 = vdwg.mxu0
      %v354 = vsub.f32 %v351, 1.0
      %vm355 = vcmask 392192
      %356 = vst.msk [vmem:[%s173] sm:$0xff] %vm355, %v354
      %p357 = scmp.lt.s32.totalorder %s14, 2
      %s358 = scalar_select %p357, %s14, 2
      %s359 = smul.addr %s358, 8
      %s360 = scalar_lea.vmem %s3, %s359
      // Predicated region
      $region33: #{_transform_batch.1} parent=31 // pred_check
        %p361 = pneg %p100
      $region34: #{_transform_batch.1} parent=31 // pred_check_branch
        %363 = sbr.rel (%p361) target = $region36
      $region35: #{_transform_batch.1} parent=31 // pred_region
        _
      $region36: #{_transform_batch.1} parent=31 // pred_fallthru
        _
    $region32: #{_transform_batch.1} parent=5 // pred_fallthru
      _
    %p364 = scmp.le.s32.totalorder 2, %s9
    // Predicated region
    $region37: #{_transform_batch.1} parent=5 // pred_check
      %p365 = pneg %p364
    $region38: #{_transform_batch.1} parent=5 // pred_check_branch
      %367 = sbr.rel (%p365) target = $region40
    $region39: #{_transform_batch.1} parent=5 // pred_region
      %s368 = ssub.s32 %s9, 2
      // Predicated region
      $region41: #{_transform_batch.1} parent=39 // pred_check
        %p369 = pneg %p106
      $region42: #{_transform_batch.1} parent=39 // pred_check_branch
        %371 = sbr.rel (%p369) target = $region44
      $region43: #{_transform_batch.1} parent=39 // pred_region
        %p372 = scmp.lt.s32.totalorder %s15, 2
        %s373 = scalar_select %p372, %s15, 2
        %s374 = smul.addr %s373, 8
        %s375 = scalar_lea.vmem %s3, %s374
      $region44: #{_transform_batch.1} parent=39 // pred_fallthru
        _
    $region40: #{_transform_batch.1} parent=5 // pred_fallthru
      _
  $region6: #{_transform_batch.1} parent=0 // loop_footer
    %s13 = sadd.s32 1, %s9
  $region7: #{_transform_batch.1} parent=0 // loop_footer_branch
    %8 = sbr.rel target = $region3
  $region8: #{_transform_batch.1} parent=0 // loop_exit
    _

</llo_original>
